<compile_context>
chip_gen: v7x
topology: tpu7x:2x2x1
jax: 0.10.0
libtpu: 0.0.40
codegen_flags: <defaults>
</compile_context>

<pallas_src>
import functools

import jax
import jax.numpy as jnp
from jax import lax
from jax.experimental import pallas as pl
from jax.experimental.pallas import tpu as pltpu

_LANE = 128
_SUBLANE = 8
_BLOCK_B_CAP = 4096      # single-step up to this many (padded) batch rows


def _round_up(x, m):
    return ((x + m - 1) // m) * m


def value_mlp_kernel(x_ref, w1_ref, b1_ref, w2_ref, b2_ref, w3t_ref, b3t_ref,
                     o_ref, *, compute_dtype):
    # Fused hot path, fully VMEM-resident:
    #   3 MXU matmuls (inputs optionally bf16, f32 accumulate) + f32 bias/ReLU.
    # The last matmul contracts h2's feature axis against w3t's feature axis,
    # producing the TRANSPOSED output (n_out_pad, block_b) — lane-dense along
    # the batch, ~16x fewer writeback bytes than a 128-lane-padded (B, 128).
    x = x_ref[...]                                      # already compute_dtype
    h1 = jnp.dot(x, w1_ref[...],
                 preferred_element_type=jnp.float32) + b1_ref[...]
    h1 = jnp.maximum(h1, 0.0)
    h2 = jnp.dot(h1.astype(compute_dtype), w2_ref[...],
                 preferred_element_type=jnp.float32) + b2_ref[...]
    h2 = jnp.maximum(h2, 0.0)
    out_t = lax.dot_general(                            # (n_out_pad, block_b)
        w3t_ref[...], h2.astype(compute_dtype),
        dimension_numbers=(((1,), (1,)), ((), ())),
        preferred_element_type=jnp.float32) + b3t_ref[...]
    o_ref[...] = out_t.astype(o_ref.dtype)


def value_forward(x, params, *, block_b=None, compute_dtype=jnp.float32):
    """Run the Value MLP forward pass as a single fused Pallas kernel.

    x: (B, n_inputs) float32
    params: dict with w1 (n_in, size), b1 (1, size), w2 (size, size),
            b2 (1, size), w3 (size, n_out), b3 (1, n_out)
    Returns (B, n_out) float32.
    """
    B, n_in = x.shape
    size = params["w1"].shape[1]
    n_out = params["w3"].shape[1]

    # --- Transposed fc3: n_out lives on sublanes (pad to 8), batch on lanes. ---
    n_out_pad = _round_up(n_out, _SUBLANE)
    w3t = params["w3"].T                                # (n_out, size)
    b3t = params["b3"].T                                # (n_out, 1)
    if n_out_pad != n_out:
        w3t = jnp.pad(w3t, ((0, n_out_pad - n_out), (0, 0)))
        b3t = jnp.pad(b3t, ((0, n_out_pad - n_out), (0, 0)))

    # --- Batch tiling: default is ONE grid step (single-TC chips pay pure
    #     overhead per extra step); only split when the batch is big enough that
    #     each tile is a large, 128-lane-aligned chunk. ---
    if block_b is None:
        B8 = _round_up(max(B, 1), _SUBLANE)
        if B8 <= _BLOCK_B_CAP:
            block_b = B8
            n_blocks = 1
        else:
            n_blocks = pl.cdiv(B, _BLOCK_B_CAP)
            block_b = _round_up(pl.cdiv(B, n_blocks), _LANE)
            n_blocks = pl.cdiv(B, block_b)
    else:
        if block_b % _SUBLANE != 0:
            raise ValueError(f"block_b must be a multiple of {_SUBLANE}, got {block_b}")
        n_blocks = pl.cdiv(B, block_b)
        if n_blocks > 1 and block_b % _LANE != 0:
            # batch is the lane axis of the transposed output tile
            raise ValueError(
                f"multi-step grids need block_b % {_LANE} == 0, got {block_b}")

    B_pad = n_blocks * block_b
    if B_pad != B:
        # Zero-pad the batch; padded rows are computed (cheap) and sliced away.
        x = jnp.pad(x, ((0, B_pad - B), (0, 0)))

    # --- bf16 path: cast x + weights OUTSIDE the kernel (smaller DMAs / resident
    #     weights, no per-step casts). Biases stay f32 (f32 epilogue). ---
    w1, w2 = params["w1"], params["w2"]
    if compute_dtype != jnp.float32:
        x = x.astype(compute_dtype)
        w1 = w1.astype(compute_dtype)
        w2 = w2.astype(compute_dtype)
        w3t = w3t.astype(compute_dtype)
    b1, b2 = params["b1"], params["b2"]

    # --- VMEM budget: tight estimate + headroom; validate rather than clamp. ---
    in_item = jnp.dtype(compute_dtype).itemsize
    f32b = 4
    tile_bytes = 2 * block_b * n_in * in_item              # double-buffered x tile
    out_bytes = 2 * n_out_pad * block_b * f32b             # double-buffered out tile
    weight_bytes = 2 * ((n_in * size + size * size + n_out_pad * size) * in_item
                        + (2 * size + n_out_pad) * f32b)   # resident weights/biases
    interm_bytes = 4 * block_b * size * f32b               # h1/h2 + casts (rough)
    vmem_budget = tile_bytes + out_bytes + weight_bytes + interm_bytes + (4 << 20)
    phys_vmem = 64 << 20   # v7x per-TC physical VMEM (smallest across v5e/v6e/v7x)
    if vmem_budget > phys_vmem - (4 << 20):
        raise ValueError(
            f"block_b={block_b} needs ~{vmem_budget >> 20} MiB VMEM; "
            f"reduce block_b (physical VMEM is {phys_vmem >> 20} MiB).")
    vmem_limit = int(vmem_budget)

    const2d = lambda i: (0, 0)   # weights/biases: same block every step -> resident

    out_t = pl.pallas_call(
        functools.partial(value_mlp_kernel, compute_dtype=compute_dtype),
        out_shape=jax.ShapeDtypeStruct((n_out_pad, B_pad), jnp.float32),
        grid_spec=pltpu.PrefetchScalarGridSpec(
            num_scalar_prefetch=0,
            grid=(n_blocks,),
            in_specs=[
                pl.BlockSpec((block_b, n_in), lambda i: (i, 0)),   # x tile over batch
                pl.BlockSpec((n_in, size), const2d),               # w1
                pl.BlockSpec((1, size), const2d),                  # b1
                pl.BlockSpec((size, size), const2d),               # w2
                pl.BlockSpec((1, size), const2d),                  # b2
                pl.BlockSpec((n_out_pad, size), const2d),          # w3 transposed
                pl.BlockSpec((n_out_pad, 1), const2d),             # b3 transposed
            ],
            out_specs=pl.BlockSpec((n_out_pad, block_b), lambda i: (0, i)),
        ),
        compiler_params=pltpu.CompilerParams(
            dimension_semantics=("parallel",),   # only matters when n_blocks > 1
            vmem_limit_bytes=vmem_limit,
        ),
    )(x, w1, b1, w2, b2, w3t, b3t)

    # Output is tiny (n_out_pad rows x B_pad), so this slice/transpose is cheap.
    return out_t[:n_out, :B].T


def init_value_params(key, n_inputs, n_outputs=1, size=32):
    """Deterministic init mirroring nn.Linear default (uniform +/- 1/sqrt(fan_in))."""
    ks = jax.random.split(key, 6)

    def linear(kw, kb, fan_in, fan_out):
        bound = 1.0 / jnp.sqrt(jnp.float32(fan_in))
        w = jax.random.uniform(kw, (fan_in, fan_out), jnp.float32, -bound, bound)
        b = jax.random.uniform(kb, (1, fan_out), jnp.float32, -bound, bound)
        return w, b

    w1, b1 = linear(ks[0], ks[1], n_inputs, size)
    w2, b2 = linear(ks[2], ks[3], size, size)
    w3, b3 = linear(ks[4], ks[5], size, n_outputs)
    return {"w1": w1, "b1": b1, "w2": w2, "b2": b2, "w3": w3, "b3": b3}


def value_forward_ref(x, p):
    h1 = jnp.maximum(x @ p["w1"] + p["b1"], 0.0)
    h2 = jnp.maximum(h1 @ p["w2"] + p["b2"], 0.0)
    return h2 @ p["w3"] + p["b3"]


if __name__ == "__main__":
    key = jax.random.PRNGKey(0)
    k_params, k_x1, k_x2, k_x3 = jax.random.split(key, 4)

    batch, n_inputs, size, n_outputs = 8, 16, 32, 1
    params = init_value_params(k_params, n_inputs, n_outputs=n_outputs, size=size)

    # Small case (matches the RL module's typical usage): single grid step.
    x_small = jax.random.normal(k_x1, (batch, n_inputs), dtype=jnp.float32)
    out_small = jax.block_until_ready(value_forward(x_small, params))
    ref_small = jax.block_until_ready(value_forward_ref(x_small, params))
    assert out_small.shape == (batch, n_outputs)
    assert jnp.allclose(out_small, ref_small, atol=1e-5, rtol=1e-5)

    # Ragged batch (B=100): still ONE grid step (no forced split), batch padded.
    x_big = jax.random.normal(k_x2, (100, n_inputs), dtype=jnp.float32)
    out_big = jax.block_until_ready(value_forward(x_big, params))
    ref_big = jax.block_until_ready(value_forward_ref(x_big, params))
    assert out_big.shape == (100, n_outputs)
    assert jnp.allclose(out_big, ref_big, atol=1e-5, rtol=1e-5)

    # Explicit multi-step grid (lane-aligned tiles + cdiv batch padding).
    x_split = jax.random.normal(k_x3, (300, n_inputs), dtype=jnp.float32)
    out_split = jax.block_until_ready(value_forward(x_split, params, block_b=128))
    ref_split = jax.block_until_ready(value_forward_ref(x_split, params))
    assert out_split.shape == (300, n_outputs)
    assert jnp.allclose(out_split, ref_split, atol=1e-5, rtol=1e-5)

    # bf16 MXU path (wrapper-side casts, f32 accumulate/epilogue) — loose tol.
    out_bf16 = jax.block_until_ready(
        value_forward(x_small, params, compute_dtype=jnp.bfloat16))
    assert out_bf16.shape == (batch, n_outputs)
    assert jnp.allclose(out_bf16, ref_small, atol=1e-1, rtol=1e-1)

    print("KERNEL_OK")
</pallas_src>

<mosaic_0001>
module attributes {stable_mosaic.version = 11 : i64} {
  func.func @value_mlp_kernel(%arg0: i32, %arg1: memref<8x16xf32, #tpu.memory_space<vmem>>, %arg2: memref<16x32xf32, #tpu.memory_space<vmem>>, %arg3: memref<1x32xf32, #tpu.memory_space<vmem>>, %arg4: memref<32x32xf32, #tpu.memory_space<vmem>>, %arg5: memref<1x32xf32, #tpu.memory_space<vmem>>, %arg6: memref<8x32xf32, #tpu.memory_space<vmem>>, %arg7: memref<8x1xf32, #tpu.memory_space<vmem>>, %arg8: memref<8x8xf32, #tpu.memory_space<vmem>>) attributes {dimension_semantics = [#tpu.dimension_semantics<parallel>], iteration_bounds = array<i64: 1>, scalar_prefetch = 0 : i64, scratch_operands = 0 : i64, tpu.core_type = #tpu.core_type<tc>, window_params = [{transform_indices = @transform_0, window_bounds = array<i64: 8, 16>}, {pipeline_mode = #tpu.pipeline_mode<synchronous>, transform_indices = @transform_1, window_bounds = array<i64: 16, 32>}, {pipeline_mode = #tpu.pipeline_mode<synchronous>, transform_indices = @transform_2, window_bounds = array<i64: 1, 32>}, {pipeline_mode = #tpu.pipeline_mode<synchronous>, transform_indices = @transform_3, window_bounds = array<i64: 32, 32>}, {pipeline_mode = #tpu.pipeline_mode<synchronous>, transform_indices = @transform_4, window_bounds = array<i64: 1, 32>}, {pipeline_mode = #tpu.pipeline_mode<synchronous>, transform_indices = @transform_5, window_bounds = array<i64: 8, 32>}, {pipeline_mode = #tpu.pipeline_mode<synchronous>, transform_indices = @transform_6, window_bounds = array<i64: 8, 1>}, {transform_indices = @transform_7, window_bounds = array<i64: 8, 8>}]} {
    %c0 = arith.constant 0 : index
    %c0_0 = arith.constant 0 : index
    %0 = vector.load %arg1[%c0, %c0_0] : memref<8x16xf32, #tpu.memory_space<vmem>>, vector<8x16xf32>
    %c0_1 = arith.constant 0 : index
    %c0_2 = arith.constant 0 : index
    %1 = vector.load %arg2[%c0_1, %c0_2] : memref<16x32xf32, #tpu.memory_space<vmem>>, vector<16x32xf32>
    %cst = arith.constant dense<0.000000e+00> : vector<8x32xf32>
    %2 = tpu.matmul %0, %1, %cst {dimension_numbers = #tpu.dot_dimension_numbers<[1], [0], [0], [1], [0, 0, 1, 1], [], []>} : vector<8x16xf32>, vector<16x32xf32>, vector<8x32xf32> -> vector<8x32xf32>
    %c0_3 = arith.constant 0 : index
    %c0_4 = arith.constant 0 : index
    %3 = vector.load %arg3[%c0_3, %c0_4] : memref<1x32xf32, #tpu.memory_space<vmem>>, vector<1x32xf32>
    %4 = vector.broadcast %3 : vector<1x32xf32> to vector<8x32xf32>
    %5 = arith.addf %2, %4 : vector<8x32xf32>
    %cst_5 = arith.constant 0.000000e+00 : f32
    %6 = vector.broadcast %cst_5 : f32 to vector<8x32xf32>
    %7 = arith.maximumf %5, %6 : vector<8x32xf32>
    %c0_6 = arith.constant 0 : index
    %c0_7 = arith.constant 0 : index
    %8 = vector.load %arg4[%c0_6, %c0_7] : memref<32x32xf32, #tpu.memory_space<vmem>>, vector<32x32xf32>
    %cst_8 = arith.constant dense<0.000000e+00> : vector<8x32xf32>
    %9 = tpu.matmul %7, %8, %cst_8 {dimension_numbers = #tpu.dot_dimension_numbers<[1], [0], [0], [1], [0, 0, 1, 1], [], []>} : vector<8x32xf32>, vector<32x32xf32>, vector<8x32xf32> -> vector<8x32xf32>
    %c0_9 = arith.constant 0 : index
    %c0_10 = arith.constant 0 : index
    %10 = vector.load %arg5[%c0_9, %c0_10] : memref<1x32xf32, #tpu.memory_space<vmem>>, vector<1x32xf32>
    %11 = vector.broadcast %10 : vector<1x32xf32> to vector<8x32xf32>
    %12 = arith.addf %9, %11 : vector<8x32xf32>
    %cst_11 = arith.constant 0.000000e+00 : f32
    %13 = vector.broadcast %cst_11 : f32 to vector<8x32xf32>
    %14 = arith.maximumf %12, %13 : vector<8x32xf32>
    %c0_12 = arith.constant 0 : index
    %c0_13 = arith.constant 0 : index
    %15 = vector.load %arg6[%c0_12, %c0_13] : memref<8x32xf32, #tpu.memory_space<vmem>>, vector<8x32xf32>
    %cst_14 = arith.constant dense<0.000000e+00> : vector<8x8xf32>
    %16 = tpu.matmul %15, %14, %cst_14 {dimension_numbers = #tpu.dot_dimension_numbers<[1], [1], [0], [0], [0, 0, 1, 0], [], []>} : vector<8x32xf32>, vector<8x32xf32>, vector<8x8xf32> -> vector<8x8xf32>
    %c0_15 = arith.constant 0 : index
    %c0_16 = arith.constant 0 : index
    %17 = vector.load %arg7[%c0_15, %c0_16] : memref<8x1xf32, #tpu.memory_space<vmem>>, vector<8x1xf32>
    %18 = vector.broadcast %17 : vector<8x1xf32> to vector<8x8xf32>
    %19 = arith.addf %16, %18 : vector<8x8xf32>
    %c0_17 = arith.constant 0 : index
    %c0_18 = arith.constant 0 : index
    %20 = vector.load %arg8[%c0_17, %c0_18] : memref<8x8xf32, #tpu.memory_space<vmem>>, vector<8x8xf32>
    tpu.vector_store %arg8[%c0_17, %c0_18], %19 {strides = array<i32>} : memref<8x8xf32, #tpu.memory_space<vmem>>, vector<8x8xf32>,
    return
  }
  func.func @transform_0(%arg0: i32) -> (i32, i32) {
    %c0_i32 = arith.constant 0 : i32
    %c0_i32_0 = arith.constant 0 : i32
    return %arg0, %c0_i32 : i32, i32
  }
  func.func @transform_1(%arg0: i32) -> (i32, i32) {
    %c0_i32 = arith.constant 0 : i32
    %c0_i32_0 = arith.constant 0 : i32
    %c0_i32_1 = arith.constant 0 : i32
    return %c0_i32, %c0_i32_0 : i32, i32
  }
  func.func @transform_2(%arg0: i32) -> (i32, i32) {
    %c0_i32 = arith.constant 0 : i32
    %c0_i32_0 = arith.constant 0 : i32
    %c0_i32_1 = arith.constant 0 : i32
    return %c0_i32, %c0_i32_0 : i32, i32
  }
  func.func @transform_3(%arg0: i32) -> (i32, i32) {
    %c0_i32 = arith.constant 0 : i32
    %c0_i32_0 = arith.constant 0 : i32
    %c0_i32_1 = arith.constant 0 : i32
    return %c0_i32, %c0_i32_0 : i32, i32
  }
  func.func @transform_4(%arg0: i32) -> (i32, i32) {
    %c0_i32 = arith.constant 0 : i32
    %c0_i32_0 = arith.constant 0 : i32
    %c0_i32_1 = arith.constant 0 : i32
    return %c0_i32, %c0_i32_0 : i32, i32
  }
  func.func @transform_5(%arg0: i32) -> (i32, i32) {
    %c0_i32 = arith.constant 0 : i32
    %c0_i32_0 = arith.constant 0 : i32
    %c0_i32_1 = arith.constant 0 : i32
    return %c0_i32, %c0_i32_0 : i32, i32
  }
  func.func @transform_6(%arg0: i32) -> (i32, i32) {
    %c0_i32 = arith.constant 0 : i32
    %c0_i32_0 = arith.constant 0 : i32
    %c0_i32_1 = arith.constant 0 : i32
    return %c0_i32, %c0_i32_0 : i32, i32
  }
  func.func @transform_7(%arg0: i32) -> (i32, i32) {
    %c0_i32 = arith.constant 0 : i32
    %c0_i32_0 = arith.constant 0 : i32
    return %c0_i32, %arg0 : i32, i32
  }
}

</mosaic_0001>

<llo_original>
// kernel: tpu_custom_call.1
$region0: #{tpu_custom_call.1}
  #allocation0 [shape = 'u32[]', space=smem, size = 0x4, offset = 0x4, fixed_abs, tag = 'smem constant byte address 0x4 - core index']
  #allocation1 [shape = 'u32[144,128]{1,0:T(1,128)}', space=vmem, size = 0x12000, scoped, tag = 'internal scratch']
  %s0 = inlined_call_operand.vmem [shape: f32[8,16], index: 0, kind: input, shape index: {}]
  %s1 = inlined_call_operand.hbm [shape: f32[16,32], index: 1, kind: input, shape index: {}]
  %s2 = inlined_call_operand.hbm [shape: f32[1,32], index: 2, kind: input, shape index: {}]
  %s3 = inlined_call_operand.hbm [shape: f32[32,32], index: 3, kind: input, shape index: {}]
  %s4 = inlined_call_operand.vmem [shape: f32[1,32], index: 4, kind: input, shape index: {}]
  %s5 = inlined_call_operand.vmem [shape: f32[8,32], index: 5, kind: input, shape index: {}]
  %s6 = inlined_call_operand.vmem [shape: f32[8,1], index: 6, kind: input, shape index: {}]
  %s7 = inlined_call_operand.hbm [shape: f32[8,8], index: 7, kind: output, shape index: {}]
  %s8 = sld [smem:[#allocation0]]
  $region50: #{tpu_custom_call.1} parent=0
    _
  %s10 = ssub.s32 1, %s8
  %s11 = scalar_select 0, %s10, %s8
  $region1: #{tpu_custom_call.1} parent=0
    #allocation2 [shape = 'u8[8192]{0}', space=vmem, size = 0x2000, scoped, tag = 'input window, operand 1, single buffered']
    #allocation3 [shape = 's32[1]{0}', space=sflag, size = 0x4, scoped, tag = 'scoped memory for tpu_custom_call.1']
    #allocation4 [shape = 's32[1]{0}', space=sflag, size = 0x4, scoped, tag = 'scoped memory for tpu_custom_call.1']
    #allocation5 [shape = 'u8[512]{0}', space=vmem, size = 0x400, scoped, tag = 'input window, operand 2, single buffered']
    #allocation6 [shape = 's32[1]{0}', space=sflag, size = 0x4, scoped, tag = 'scoped memory for tpu_custom_call.1']
    #allocation7 [shape = 'u8[16384]{0}', space=vmem, size = 0x4000, scoped, tag = 'input window, operand 3, single buffered']
    #allocation8 [shape = 'u8[4096]{0}', space=vmem, size = 0x1000, scoped, tag = 'output window, operand 0, single buffered']
    %12 = vsyncpa [#allocation3], 0
    %13 = vsyncpa [#allocation6], 0
    %14 = vsyncpa [#allocation4], 0
    // Predicated region
    $region2: #{tpu_custom_call.1} parent=1 // pred_check
      _
    $region3: #{tpu_custom_call.1} parent=1 // pred_check_branch
      %16 = sbr.rel (0) target = $region5
    $region4: #{tpu_custom_call.1} parent=1 // pred_region
      _
    $region5: #{tpu_custom_call.1} parent=1 // pred_fallthru
      _
    // Predicated region
    $region6: #{tpu_custom_call.1} parent=1 // pred_check
      _
    $region7: #{tpu_custom_call.1} parent=1 // pred_check_branch
      %18 = sbr.rel (0) target = $region9
    $region8: #{tpu_custom_call.1} parent=1 // pred_region
      %s20 = ssub.s32 256, 256
      %21 = vsyncadd [#allocation3], %s20
      %s22 = sshll.u32 [#allocation2], 4
      %s23 = int_to_ptr.vmem [resolvable:$true] %s22
      %28 = dma.hbm_to_vmem [thread:$0]  %s1, 256, %s23, [#allocation3], 128, 128, 8
    $region9: #{tpu_custom_call.1} parent=1 // pred_fallthru
      _
    // Predicated region
    $region10: #{tpu_custom_call.1} parent=1 // pred_check
      _
    $region11: #{tpu_custom_call.1} parent=1 // pred_check_branch
      %30 = sbr.rel (0) target = $region13
    $region12: #{tpu_custom_call.1} parent=1 // pred_region
      %s32 = ssub.s32 16, 16
      %33 = vsyncadd [#allocation6], %s32
      %s35 = sshll.u32 [#allocation5], 4
      %s36 = int_to_ptr.vmem [resolvable:$true] %s35
      %38 = dma.hbm_to_vmem [thread:$0]  %s2, 16, %s36, [#allocation6]
    $region13: #{tpu_custom_call.1} parent=1 // pred_fallthru
      _
    // Predicated region
    $region14: #{tpu_custom_call.1} parent=1 // pred_check
      _
    $region15: #{tpu_custom_call.1} parent=1 // pred_check_branch
      %40 = sbr.rel (0) target = $region17
    $region16: #{tpu_custom_call.1} parent=1 // pred_region
      %s42 = ssub.s32 512, 512
      %43 = vsyncadd [#allocation6], %s42
      %s44 = sshll.u32 [#allocation7], 4
      %s45 = int_to_ptr.vmem [resolvable:$true] %s44
      %50 = dma.hbm_to_vmem [thread:$0]  %s3, 512, %s45, [#allocation6], 128, 128, 8
    $region17: #{tpu_custom_call.1} parent=1 // pred_fallthru
      _
    // Predicated region
    $region18: #{tpu_custom_call.1} parent=1 // pred_check
      _
    $region19: #{tpu_custom_call.1} parent=1 // pred_check_branch
      %52 = sbr.rel (0) target = $region21
    $region20: #{tpu_custom_call.1} parent=1 // pred_region
      _
    $region21: #{tpu_custom_call.1} parent=1 // pred_fallthru
      _
    // Predicated region
    $region22: #{tpu_custom_call.1} parent=1 // pred_check
      _
    $region23: #{tpu_custom_call.1} parent=1 // pred_check_branch
      %54 = sbr.rel (0) target = $region25
    $region24: #{tpu_custom_call.1} parent=1 // pred_region
      _
    $region25: #{tpu_custom_call.1} parent=1 // pred_fallthru
      _
    // Predicated region
    $region26: #{tpu_custom_call.1} parent=1 // pred_check
      _
    $region27: #{tpu_custom_call.1} parent=1 // pred_check_branch
      %56 = sbr.rel (0) target = $region29
    $region28: #{tpu_custom_call.1} parent=1 // pred_region
      _
    $region29: #{tpu_custom_call.1} parent=1 // pred_fallthru
      _
    // Predicated region
    $region30: #{tpu_custom_call.1} parent=1 // pred_check
      _
    $region31: #{tpu_custom_call.1} parent=1 // pred_check_branch
      %58 = sbr.rel (0) target = $region33
    $region32: #{tpu_custom_call.1} parent=1 // pred_region
      %59 = dma.done [#allocation3], 256
    $region33: #{tpu_custom_call.1} parent=1 // pred_fallthru
      _
    // Predicated region
    $region34: #{tpu_custom_call.1} parent=1 // pred_check
      _
    $region35: #{tpu_custom_call.1} parent=1 // pred_check_branch
      %61 = sbr.rel (0) target = $region37
    $region36: #{tpu_custom_call.1} parent=1 // pred_region
      %62 = dma.done [#allocation6], 16
    $region37: #{tpu_custom_call.1} parent=1 // pred_fallthru
      _
    // Predicated region
    $region38: #{tpu_custom_call.1} parent=1 // pred_check
      _
    $region39: #{tpu_custom_call.1} parent=1 // pred_check_branch
      %64 = sbr.rel (0) target = $region41
    $region40: #{tpu_custom_call.1} parent=1 // pred_region
      %65 = dma.done [#allocation6], 512
    $region41: #{tpu_custom_call.1} parent=1 // pred_fallthru
      _
    %v66 = vld [vmem:[%s0] sm:$0xff]
    %v67 = vld [vmem:[#allocation2] sm:$0xff]
    %v68 = vld [vmem:[#allocation2 + $0x8] sm:$0xff]
    %v69 = vld [vmem:[#allocation5] sm:$0x1]
    %v71 = vlaneseq
    %v72 = vshrl.u32 %v71, 7
    %v73 = vsub.s32 0, %v72
    %v74 = vrot.slane %v69, %v73
    %vm76 = vcmask 130048
    %v78 = vsel %vm76, %v66, 0
    %80 = vmatprep.subr.mxu0 0.0
    %81 = vmatpush1.msra.mxu0 %v67
    %82 = vmatprep.subr.mxu0 0.0
    %83 = vmatpush1.msra.mxu0 %v68
    %84 = vmatprep.subr.mxu0 0.0
    %85 = vmatpush1.msra.mxu0 0.0
    %86 = vmatprep.subr.mxu0 0.0
    %87 = vmatpush1.msra.mxu0 0.0
    %88 = vmatprep.subr.mxu0 0.0
    %89 = vmatpush1.msra.mxu0 0.0
    %90 = vmatprep.subr.mxu0 0.0
    %91 = vmatpush1.msra.mxu0 0.0
    %92 = vmatprep.subr.mxu0 0.0
    %93 = vmatpush1.msra.mxu0 0.0
    %94 = vmatprep.subr.mxu0 0.0
    %95 = vmatpush1.msra.mxu0 0.0
    %96 = vmatprep.subr.mxu0 0.0
    %97 = vmatpush1.msra.mxu0 0.0
    %98 = vmatprep.subr.mxu0 0.0
    %99 = vmatpush1.msra.mxu0 0.0
    %100 = vmatprep.subr.mxu0 0.0
    %101 = vmatpush1.msra.mxu0 0.0
    %102 = vmatprep.subr.mxu0 0.0
    %103 = vmatpush1.msra.mxu0 0.0
    %104 = vmatprep.subr.mxu0 0.0
    %105 = vmatpush1.msra.mxu0 0.0
    %106 = vmatprep.subr.mxu0 0.0
    %107 = vmatpush1.msra.mxu0 0.0
    %108 = vmatprep.subr.mxu0 0.0
    %109 = vmatpush1.msra.mxu0 0.0
    %110 = vmatprep.subr.mxu0 0.0
    %111 = vmatpush1.msra.mxu0 0.0
    %112 = vmatprep.subr.mxu0 0.0
    %113 = vmatpush1.msra.mxu0 0.0
    %114 = vmatprep.subr.mxu0 0.0
    %115 = vmatpush1.msra.mxu0 0.0
    %116 = vmatprep.subr.mxu0 0.0
    %117 = vmatpush1.msra.mxu0 0.0
    %118 = vmatprep.subr.mxu0 0.0
    %119 = vmatpush1.msra.mxu0 0.0
    %120 = vmatprep.subr.mxu0 0.0
    %121 = vmatpush1.msra.mxu0 0.0
    %122 = vmatprep.subr.mxu0 0.0
    %123 = vmatpush1.msra.mxu0 0.0
    %124 = vmatprep.subr.mxu0 0.0
    %125 = vmatpush1.msra.mxu0 0.0
    %126 = vmatprep.subr.mxu0 0.0
    %127 = vmatpush1.msra.mxu0 0.0
    %128 = vmatprep.subr.mxu0 0.0
    %129 = vmatpush1.msra.mxu0 0.0
    %130 = vmatprep.subr.mxu0 0.0
    %131 = vmatpush1.msra.mxu0 0.0
    %132 = vmatprep.subr.mxu0 0.0
    %133 = vmatpush1.msra.mxu0 0.0
    %134 = vmatprep.subr.mxu0 0.0
    %135 = vmatpush1.msra.mxu0 0.0
    %136 = vmatprep.subr.mxu0 0.0
    %137 = vmatpush1.msra.mxu0 0.0
    %138 = vmatprep.subr.mxu0 0.0
    %139 = vmatpush1.msra.mxu0 0.0
    %140 = vmatprep.subr.mxu0 0.0
    %141 = vmatpush1.msra.mxu0 0.0
    %142 = vmatprep.subr.mxu0 0.0
    %143 = vmatpush1.msra.mxu0 0.0
    %144 = vmatprep.mubr.f32.mxu0 0.0
    %145 = vmatmul.mubr.f32.gmra.mrb[0].mxu0 %v78
    %v146 = vpop.f32.mrb[0].mxu0
    %v147 = vadd.f32 %v74, %v146
    %v148 = vpop.f32.mrb[0].mxu0
    %149 = vdwg.mxu0
    %v150 = vmax.f32 %v147, 0.0
    %v151 = vld [vmem:[#allocation7] sm:$0xff]
    %v152 = vld [vmem:[#allocation7 + $0x8] sm:$0xff]
    %v153 = vld [vmem:[#allocation7 + $0x10] sm:$0xff]
    %v154 = vld [vmem:[#allocation7 + $0x18] sm:$0xff]
    %v155 = vld [vmem:[%s4] sm:$0x1]
    %v157 = vlaneseq
    %v158 = vshrl.u32 %v157, 7
    %v159 = vsub.s32 0, %v158
    %v160 = vrot.slane %v155, %v159
    %vm162 = vcmask 261120
    %v164 = vsel %vm162, %v150, 0
    %166 = vmatprep.subr.mxu0 0.0
    %167 = vmatpush1.msra.mxu0 %v151
    %168 = vmatprep.subr.mxu0 0.0
    %169 = vmatpush1.msra.mxu0 %v152
    %170 = vmatprep.subr.mxu0 0.0
    %171 = vmatpush1.msra.mxu0 %v153
    %172 = vmatprep.subr.mxu0 0.0
    %173 = vmatpush1.msra.mxu0 %v154
    %174 = vmatprep.subr.mxu0 0.0
    %175 = vmatpush1.msra.mxu0 0.0
    %176 = vmatprep.subr.mxu0 0.0
    %177 = vmatpush1.msra.mxu0 0.0
    %178 = vmatprep.subr.mxu0 0.0
    %179 = vmatpush1.msra.mxu0 0.0
    %180 = vmatprep.subr.mxu0 0.0
    %181 = vmatpush1.msra.mxu0 0.0
    %182 = vmatprep.subr.mxu0 0.0
    %183 = vmatpush1.msra.mxu0 0.0
    %184 = vmatprep.subr.mxu0 0.0
    %185 = vmatpush1.msra.mxu0 0.0
    %186 = vmatprep.subr.mxu0 0.0
    %187 = vmatpush1.msra.mxu0 0.0
    %188 = vmatprep.subr.mxu0 0.0
    %189 = vmatpush1.msra.mxu0 0.0
    %190 = vmatprep.subr.mxu0 0.0
    %191 = vmatpush1.msra.mxu0 0.0
    %192 = vmatprep.subr.mxu0 0.0
    %193 = vmatpush1.msra.mxu0 0.0
    %194 = vmatprep.subr.mxu0 0.0
    %195 = vmatpush1.msra.mxu0 0.0
    %196 = vmatprep.subr.mxu0 0.0
    %197 = vmatpush1.msra.mxu0 0.0
    %198 = vmatprep.subr.mxu0 0.0
    %199 = vmatpush1.msra.mxu0 0.0
    %200 = vmatprep.subr.mxu0 0.0
    %201 = vmatpush1.msra.mxu0 0.0
    %202 = vmatprep.subr.mxu0 0.0
    %203 = vmatpush1.msra.mxu0 0.0
    %204 = vmatprep.subr.mxu0 0.0
    %205 = vmatpush1.msra.mxu0 0.0
    %206 = vmatprep.subr.mxu0 0.0
    %207 = vmatpush1.msra.mxu0 0.0
    %208 = vmatprep.subr.mxu0 0.0
    %209 = vmatpush1.msra.mxu0 0.0
    %210 = vmatprep.subr.mxu0 0.0
    %211 = vmatpush1.msra.mxu0 0.0
    %212 = vmatprep.subr.mxu0 0.0
    %213 = vmatpush1.msra.mxu0 0.0
    %214 = vmatprep.subr.mxu0 0.0
    %215 = vmatpush1.msra.mxu0 0.0
    %216 = vmatprep.subr.mxu0 0.0
    %217 = vmatpush1.msra.mxu0 0.0
    %218 = vmatprep.subr.mxu0 0.0
    %219 = vmatpush1.msra.mxu0 0.0
    %220 = vmatprep.subr.mxu0 0.0
    %221 = vmatpush1.msra.mxu0 0.0
    %222 = vmatprep.subr.mxu0 0.0
    %223 = vmatpush1.msra.mxu0 0.0
    %224 = vmatprep.subr.mxu0 0.0
    %225 = vmatpush1.msra.mxu0 0.0
    %226 = vmatprep.subr.mxu0 0.0
    %227 = vmatpush1.msra.mxu0 0.0
    %228 = vmatprep.subr.mxu0 0.0
    %229 = vmatpush1.msra.mxu0 0.0
    %230 = vmatprep.mubr.f32.mxu0 0.0
    %231 = vmatmul.mubr.f32.gmra.mrb[0].mxu0 %v164
    %v232 = vpop.f32.mrb[0].mxu0
    %v233 = vadd.f32 %v160, %v232
    %v234 = vpop.f32.mrb[0].mxu0
    %235 = vdwg.mxu0
    %v236 = vmax.f32 %v233, 0.0
    %v237 = vld [vmem:[%s5] sm:$0xff]
    %v238 = vld [vmem:[%s6] sm:$0xff]
    %240 = vset.pattern.permute.xlu0 0
    %241 = vperm.xlu0 %240, %v238
    %v242 = vpop.permute.xlu0 %241
    %v245 = vsel %vm162, %v237, 0
    %v248 = vsel %vm162, %v236, 0
    %250 = vmatprep.subr.mxu0 0.0
    %251 = vmatpush1.xpose.msra.mxu0 %v248
    %252 = vmatprep.subr.mxu0 0.0
    %253 = vmatpush1.xpose.msra.mxu0 0.0
    %254 = vmatprep.subr.mxu0 0.0
    %255 = vmatpush1.xpose.msra.mxu0 0.0
    %256 = vmatprep.subr.mxu0 0.0
    %257 = vmatpush1.xpose.msra.mxu0 0.0
    %258 = vmatprep.subr.mxu0 0.0
    %259 = vmatpush1.xpose.msra.mxu0 0.0
    %260 = vmatprep.subr.mxu0 0.0
    %261 = vmatpush1.xpose.msra.mxu0 0.0
    %262 = vmatprep.subr.mxu0 0.0
    %263 = vmatpush1.xpose.msra.mxu0 0.0
    %264 = vmatprep.subr.mxu0 0.0
    %265 = vmatpush1.xpose.msra.mxu0 0.0
    %266 = vmatprep.subr.mxu0 0.0
    %267 = vmatpush1.xpose.msra.mxu0 0.0
    %268 = vmatprep.subr.mxu0 0.0
    %269 = vmatpush1.xpose.msra.mxu0 0.0
    %270 = vmatprep.subr.mxu0 0.0
    %271 = vmatpush1.xpose.msra.mxu0 0.0
    %272 = vmatprep.subr.mxu0 0.0
    %273 = vmatpush1.xpose.msra.mxu0 0.0
    %274 = vmatprep.subr.mxu0 0.0
    %275 = vmatpush1.xpose.msra.mxu0 0.0
    %276 = vmatprep.subr.mxu0 0.0
    %277 = vmatpush1.xpose.msra.mxu0 0.0
    %278 = vmatprep.subr.mxu0 0.0
    %279 = vmatpush1.xpose.msra.mxu0 0.0
    %280 = vmatprep.subr.mxu0 0.0
    %281 = vmatpush1.xpose.msra.mxu0 0.0
    %282 = vmatprep.subr.mxu0 0.0
    %283 = vmatpush1.xpose.msra.mxu0 0.0
    %284 = vmatprep.subr.mxu0 0.0
    %285 = vmatpush1.xpose.msra.mxu0 0.0
    %286 = vmatprep.subr.mxu0 0.0
    %287 = vmatpush1.xpose.msra.mxu0 0.0
    %288 = vmatprep.subr.mxu0 0.0
    %289 = vmatpush1.xpose.msra.mxu0 0.0
    %290 = vmatprep.subr.mxu0 0.0
    %291 = vmatpush1.xpose.msra.mxu0 0.0
    %292 = vmatprep.subr.mxu0 0.0
    %293 = vmatpush1.xpose.msra.mxu0 0.0
    %294 = vmatprep.subr.mxu0 0.0
    %295 = vmatpush1.xpose.msra.mxu0 0.0
    %296 = vmatprep.subr.mxu0 0.0
    %297 = vmatpush1.xpose.msra.mxu0 0.0
    %298 = vmatprep.subr.mxu0 0.0
    %299 = vmatpush1.xpose.msra.mxu0 0.0
    %300 = vmatprep.subr.mxu0 0.0
    %301 = vmatpush1.xpose.msra.mxu0 0.0
    %302 = vmatprep.subr.mxu0 0.0
    %303 = vmatpush1.xpose.msra.mxu0 0.0
    %304 = vmatprep.subr.mxu0 0.0
    %305 = vmatpush1.xpose.msra.mxu0 0.0
    %306 = vmatprep.subr.mxu0 0.0
    %307 = vmatpush1.xpose.msra.mxu0 0.0
    %308 = vmatprep.subr.mxu0 0.0
    %309 = vmatpush1.xpose.msra.mxu0 0.0
    %310 = vmatprep.subr.mxu0 0.0
    %311 = vmatpush1.xpose.msra.mxu0 0.0
    %312 = vmatprep.subr.mxu0 0.0
    %313 = vmatpush1.xpose.msra.mxu0 0.0
    %314 = vmatprep.mubr.f32.mxu0 0.0
    %315 = vmatmul.mubr.f32.gmra.mrb[0].mxu0 %v245
    %v316 = vpop.f32.mrb[0].mxu0
    %v317 = vadd.f32 %v242, %v316
    %v318 = vpop.f32.mrb[0].mxu0
    %319 = vdwg.mxu0
    %vm320 = vcmask 64512
    %321 = vst.msk [vmem:[#allocation8] sm:$0xff] %vm320, %v317
    // Predicated region
    $region42: #{tpu_custom_call.1} parent=1 // pred_check
      _
    $region43: #{tpu_custom_call.1} parent=1 // pred_check_branch
      %323 = sbr.rel (0) target = $region45
    $region44: #{tpu_custom_call.1} parent=1 // pred_region
      %s325 = ssub.s32 128, 128
      %326 = vsyncadd [#allocation4], %s325
      %s328 = sshll.u32 [#allocation8], 4
      %s329 = int_to_ptr.vmem [resolvable:$true] %s328
      %331 = dma.vmem_to_hbm [thread:$0]  %s329, 128, %s7, [#allocation4]
    $region45: #{tpu_custom_call.1} parent=1 // pred_fallthru
      _
    // Predicated region
    $region46: #{tpu_custom_call.1} parent=1 // pred_check
      _
    $region47: #{tpu_custom_call.1} parent=1 // pred_check_branch
      %333 = sbr.rel (0) target = $region49
    $region48: #{tpu_custom_call.1} parent=1 // pred_region
      %334 = dma.done [#allocation4], 128
    $region49: #{tpu_custom_call.1} parent=1 // pred_fallthru
      _
    %335 = vsyncpa [#allocation3], 1
    %336 = vsyncpa [#allocation6], 1
    %337 = vsyncpa [#allocation4], 1

</llo_original>
